<compile_context>
chip_gen: v6e
topology: v6e:2x2x1
jax: 0.10.0
libtpu: 0.0.40
codegen_flags: <defaults>
</compile_context>

<pallas_src>
import functools

import jax
import jax.numpy as jnp
import numpy as np
from jax.experimental import pallas as pl
from jax.experimental.pallas import tpu as pltpu


def _round_up(x, m):
    return ((x + m - 1) // m) * m


def _seq_tile(length):
    return 128 if length >= 128 else _round_up(length, 8)


# ---------------------------------------------------------------------------
# Pallas kernel 1: tiled linear  y = x @ W + b   (fused QKV proj and out_proj)
# ---------------------------------------------------------------------------
def _linear_kernel(x_ref, w_ref, b_ref, o_ref):
    acc = jnp.dot(x_ref[...], w_ref[...], preferred_element_type=jnp.float32)
    o_ref[...] = (acc + b_ref[...]).astype(o_ref.dtype)


def _linear_pallas(x2d, w, b):
    """x2d: [M, K], w: [K, N], b: [N] -> [M, N] (float32)."""
    M, K = x2d.shape
    N = w.shape[1]

    # Row (sublane) tile.
    TM = min(256, _round_up(M, 8))
    Mp = _round_up(M, TM)
    # Column (lane) tile -- keep output lane-dense (multiple of 128).
    Np = _round_up(N, 128)
    if Np <= 512:
        TN = Np
    else:
        Np = _round_up(Np, 512)
        TN = 512

    if Mp != M:
        x2d = jnp.pad(x2d, ((0, Mp - M), (0, 0)))
    if Np != N:
        w = jnp.pad(w, ((0, 0), (0, Np - N)))
        b = jnp.pad(b, (0, Np - N))
    b2d = b.reshape(1, Np)

    out = pl.pallas_call(
        _linear_kernel,
        out_shape=jax.ShapeDtypeStruct((Mp, Np), x2d.dtype),
        grid=(Mp // TM, Np // TN),
        in_specs=[
            pl.BlockSpec((TM, K), lambda i, j: (i, 0)),
            pl.BlockSpec((K, TN), lambda i, j: (0, j)),
            pl.BlockSpec((1, TN), lambda i, j: (0, j)),
        ],
        out_specs=pl.BlockSpec((TM, TN), lambda i, j: (i, j)),
        compiler_params=pltpu.CompilerParams(
            dimension_semantics=("parallel", "parallel")),
        cost_estimate=pl.CostEstimate(
            flops=int(2 * Mp * K * Np),
            transcendentals=0,
            bytes_accessed=int(4 * (Mp * K + K * Np + Np + Mp * Np))),
    )(x2d, w, b2d)
    return out[:M, :N]


# ---------------------------------------------------------------------------
# Pallas kernel 2: flash-style attention (online softmax over kv tiles)
# ---------------------------------------------------------------------------
def _attn_kernel(*refs, scale, has_mask):
    if has_mask:
        q_ref, k_ref, v_ref, mask_ref, o_ref, m_sc, l_sc, acc_sc = refs
    else:
        q_ref, k_ref, v_ref, o_ref, m_sc, l_sc, acc_sc = refs
        mask_ref = None

    ki = pl.program_id(2)

    @pl.when(ki == 0)
    def _():
        m_sc[...] = jnp.full_like(m_sc, -jnp.inf)
        l_sc[...] = jnp.zeros_like(l_sc)
        acc_sc[...] = jnp.zeros_like(acc_sc)

    q = q_ref[0]                                   # [TQ, Dh]
    k = k_ref[0]                                   # [TK, Dh]
    v = v_ref[0]                                   # [TK, Dh]

    # scores = scale * q @ k^T  (contract head dim; no explicit transpose)
    s = scale * jax.lax.dot_general(
        q, k, (((1,), (1,)), ((), ())), preferred_element_type=jnp.float32)
    if has_mask:
        s = s + mask_ref[0]

    m_prev = m_sc[...]
    m_new = jnp.maximum(m_prev, s.max(axis=-1, keepdims=True))
    alpha = jnp.exp(m_prev - m_new)
    p = jnp.exp(s - m_new)
    l_sc[...] = alpha * l_sc[...] + p.sum(axis=-1, keepdims=True)
    acc_sc[...] = alpha * acc_sc[...] + jnp.dot(
        p.astype(v.dtype), v, preferred_element_type=jnp.float32)
    m_sc[...] = m_new

    @pl.when(ki == pl.num_programs(2) - 1)
    def _():
        o_ref[0] = (acc_sc[...] / l_sc[...]).astype(o_ref.dtype)


def _attention_pallas(q, k, v, mask, num_heads, scale, tq, tk):
    """q, k, v: [B*H, Lp, Dh]; mask: None or [B, Lp, Lp] float32."""
    BH, Lp, Dh = q.shape
    has_mask = mask is not None
    kernel = functools.partial(_attn_kernel, scale=scale, has_mask=has_mask)

    in_specs = [
        pl.BlockSpec((1, tq, Dh), lambda bh, qi, ki: (bh, qi, 0)),
        pl.BlockSpec((1, tk, Dh), lambda bh, qi, ki: (bh, ki, 0)),
        pl.BlockSpec((1, tk, Dh), lambda bh, qi, ki: (bh, ki, 0)),
    ]
    args = [q, k, v]
    if has_mask:
        in_specs.append(
            pl.BlockSpec((1, tq, tk),
                         lambda bh, qi, ki: (bh // num_heads, qi, ki)))
        args.append(mask)

    bytes_accessed = 4 * (4 * BH * Lp * Dh + (int(mask.size) if has_mask else 0))
    return pl.pallas_call(
        kernel,
        out_shape=jax.ShapeDtypeStruct((BH, Lp, Dh), q.dtype),
        grid=(BH, Lp // tq, Lp // tk),
        in_specs=in_specs,
        out_specs=pl.BlockSpec((1, tq, Dh), lambda bh, qi, ki: (bh, qi, 0)),
        scratch_shapes=[
            pltpu.VMEM((tq, 1), jnp.float32),     # running max
            pltpu.VMEM((tq, 1), jnp.float32),     # running denom
            pltpu.VMEM((tq, Dh), jnp.float32),    # running numerator
        ],
        compiler_params=pltpu.CompilerParams(
            dimension_semantics=("parallel", "parallel", "arbitrary")),
        cost_estimate=pl.CostEstimate(
            flops=int(4 * BH * Lp * Lp * Dh),
            transcendentals=int(BH * Lp * Lp),
            bytes_accessed=int(bytes_accessed)),
    )(*args)


# ---------------------------------------------------------------------------
# SelfAttention.forward
# ---------------------------------------------------------------------------
def self_attention_forward(x, params, attention_mask=None):
    """params: dict with PyTorch-layout wq/bq/wk/bk/wv/bv/wo/bo ([out,in]/[out])
    and "num_heads"."""
    wq, wk, wv, wo = params["wq"], params["wk"], params["wv"], params["wo"]
    bq, bk, bv, bo = params["bq"], params["bk"], params["bv"], params["bo"]
    num_heads = params["num_heads"]
    embed_dim = wq.shape[0]

    if x.ndim != 3 or x.shape[2] != embed_dim:
        raise ValueError(
            f"The expected input shape is (batch, sequence, embed_dim=={embed_dim}). "
            f"Found {tuple(x.shape)}.")
    batch, length, _ = x.shape
    if attention_mask is not None and tuple(attention_mask.shape) != (batch, 1, length, length):
        raise ValueError(
            f"The expected attention mask shape is {(batch, 1, length, length)}. "
            f"Found {tuple(attention_mask.shape)}.")

    head_dim = embed_dim // num_heads
    scale = float(head_dim) ** -0.5
    x = x.astype(jnp.float32)

    # ---- fused QKV projection: x is read once, one MXU pass -----------------
    w_qkv = jnp.concatenate([wq.T, wk.T, wv.T], axis=1).astype(jnp.float32)
    b_qkv = jnp.concatenate([bq, bk, bv]).astype(jnp.float32)
    qkv = _linear_pallas(x.reshape(batch * length, embed_dim), w_qkv, b_qkv)
    qkv = qkv.reshape(batch, length, 3, num_heads, head_dim)
    q = qkv[:, :, 0].transpose(0, 2, 1, 3).reshape(batch * num_heads, length, head_dim)
    k = qkv[:, :, 1].transpose(0, 2, 1, 3).reshape(batch * num_heads, length, head_dim)
    v = qkv[:, :, 2].transpose(0, 2, 1, 3).reshape(batch * num_heads, length, head_dim)

    # ---- pad sequence to an aligned tile; mask out padded keys --------------
    tq = tk = _seq_tile(length)
    lp = _round_up(length, tq)
    if lp != length:
        pad = ((0, 0), (0, lp - length), (0, 0))
        q, k, v = jnp.pad(q, pad), jnp.pad(k, pad), jnp.pad(v, pad)

    mask = None
    if attention_mask is not None:
        mask = attention_mask.reshape(batch, length, length).astype(jnp.float32)
        if lp != length:
            mask = jnp.pad(mask, ((0, 0), (0, lp - length), (0, lp - length)))
    if lp != length:
        key_pad = jnp.where(jnp.arange(lp) < length, 0.0, -1e30).astype(jnp.float32)
        key_pad = jnp.broadcast_to(key_pad[None, None, :], (batch, lp, lp))
        mask = key_pad if mask is None else mask + key_pad

    # TODO(synk): training-mode dropout on the attention weights is not
    # implemented (module default p=0.0 / inference => identity).

    # ---- flash-style attention ----------------------------------------------
    o = _attention_pallas(q, k, v, mask, num_heads, scale, tq, tk)
    o = (o[:, :length]
         .reshape(batch, num_heads, length, head_dim)
         .transpose(0, 2, 1, 3)
         .reshape(batch * length, embed_dim))

    # ---- output projection ---------------------------------------------------
    out = _linear_pallas(o, wo.T.astype(jnp.float32), bo.astype(jnp.float32))
    return out.reshape(batch, length, embed_dim)


# ---------------------------------------------------------------------------
# Pure-JAX reference (correctness check only)
# ---------------------------------------------------------------------------
def _reference_forward(x, params, attention_mask=None):
    embed_dim = params["wq"].shape[0]
    num_heads = params["num_heads"]
    batch, length, _ = x.shape
    head_dim = embed_dim // num_heads
    q = x @ params["wq"].T + params["bq"]
    k = x @ params["wk"].T + params["bk"]
    v = x @ params["wv"].T + params["bv"]
    q = q.reshape(batch, length, num_heads, head_dim).transpose(0, 2, 1, 3)
    k = k.reshape(batch, length, num_heads, head_dim).transpose(0, 2, 3, 1)
    v = v.reshape(batch, length, num_heads, head_dim).transpose(0, 2, 1, 3)
    weights = (head_dim ** -0.5) * jnp.matmul(q, k)
    if attention_mask is not None:
        weights = weights + attention_mask
    weights = jax.nn.softmax(weights, axis=-1)
    out = jnp.matmul(weights, v)
    out = out.transpose(0, 2, 1, 3).reshape(batch, length, embed_dim)
    return out @ params["wo"].T + params["bo"]


if __name__ == "__main__":
    key = jax.random.PRNGKey(0)
    B, L, E, H = 2, 16, 32, 4

    keys = jax.random.split(key, 10)

    def init_w(k):
        return jax.random.normal(k, (E, E), jnp.float32) * (E ** -0.5)

    def init_b(k):
        return jax.random.normal(k, (E,), jnp.float32) * 0.02

    params = {
        "wq": init_w(keys[0]), "bq": init_b(keys[1]),
        "wk": init_w(keys[2]), "bk": init_b(keys[3]),
        "wv": init_w(keys[4]), "bv": init_b(keys[5]),
        "wo": init_w(keys[6]), "bo": init_b(keys[7]),
        "num_heads": H,
    }
    x = jax.random.normal(keys[8], (B, L, E), jnp.float32)

    # Additive causal mask, shape [B, 1, L, L] as in the PyTorch module.
    causal = jnp.where(jnp.arange(L)[None, :] <= jnp.arange(L)[:, None], 0.0, -1e9)
    attn_mask = jnp.broadcast_to(causal, (B, 1, L, L)).astype(jnp.float32)

    out_nomask = jax.block_until_ready(self_attention_forward(x, params))
    out_masked = jax.block_until_ready(self_attention_forward(x, params, attn_mask))

    ref_nomask = _reference_forward(x, params)
    ref_masked = _reference_forward(x, params, attn_mask)

    np.testing.assert_allclose(np.asarray(out_nomask), np.asarray(ref_nomask),
                               atol=2e-3, rtol=2e-3)
    np.testing.assert_allclose(np.asarray(out_masked), np.asarray(ref_masked),
                               atol=2e-3, rtol=2e-3)
    assert out_nomask.shape == (B, L, E)
    print("KERNEL_OK")
</pallas_src>

<mosaic_0001>
module attributes {stable_mosaic.version = 11 : i64} {
  func.func @_linear_kernel(%arg0: i32, %arg1: i32, %arg2: memref<32x32xf32, #tpu.memory_space<vmem>>, %arg3: memref<32x128xf32, #tpu.memory_space<vmem>>, %arg4: memref<1x128xf32, #tpu.memory_space<vmem>>, %arg5: memref<32x128xf32, #tpu.memory_space<vmem>>) attributes {dimension_semantics = [#tpu.dimension_semantics<parallel>, #tpu.dimension_semantics<parallel>], iteration_bounds = array<i64: 1, 1>, scalar_prefetch = 0 : i64, scratch_operands = 0 : i64, tpu.core_type = #tpu.core_type<tc>, window_params = [{transform_indices = @transform_0, window_bounds = array<i64: 32, 32>}, {transform_indices = @transform_1, window_bounds = array<i64: 32, 128>}, {transform_indices = @transform_2, window_bounds = array<i64: 1, 128>}, {transform_indices = @transform_3, window_bounds = array<i64: 32, 128>}]} {
    %c0 = arith.constant 0 : index
    %c0_0 = arith.constant 0 : index
    %0 = vector.load %arg2[%c0, %c0_0] : memref<32x32xf32, #tpu.memory_space<vmem>>, vector<32x32xf32>
    %c0_1 = arith.constant 0 : index
    %c0_2 = arith.constant 0 : index
    %1 = vector.load %arg3[%c0_1, %c0_2] : memref<32x128xf32, #tpu.memory_space<vmem>>, vector<32x128xf32>
    %cst = arith.constant dense<0.000000e+00> : vector<32x128xf32>
    %2 = tpu.matmul %0, %1, %cst {dimension_numbers = #tpu.dot_dimension_numbers<[1], [0], [0], [1], [0, 0, 1, 1], [], []>} : vector<32x32xf32>, vector<32x128xf32>, vector<32x128xf32> -> vector<32x128xf32>
    %c0_3 = arith.constant 0 : index
    %c0_4 = arith.constant 0 : index
    %3 = vector.load %arg4[%c0_3, %c0_4] : memref<1x128xf32, #tpu.memory_space<vmem>>, vector<1x128xf32>
    %4 = vector.broadcast %3 : vector<1x128xf32> to vector<32x128xf32>
    %5 = arith.addf %2, %4 : vector<32x128xf32>
    %c0_5 = arith.constant 0 : index
    %c0_6 = arith.constant 0 : index
    %6 = vector.load %arg5[%c0_5, %c0_6] : memref<32x128xf32, #tpu.memory_space<vmem>>, vector<32x128xf32>
    tpu.vector_store %arg5[%c0_5, %c0_6], %5 {strides = array<i32>} : memref<32x128xf32, #tpu.memory_space<vmem>>, vector<32x128xf32>,
    return
  }
  func.func @transform_0(%arg0: i32, %arg1: i32) -> (i32, i32) {
    %c0_i32 = arith.constant 0 : i32
    %c0_i32_0 = arith.constant 0 : i32
    return %arg0, %c0_i32 : i32, i32
  }
  func.func @transform_1(%arg0: i32, %arg1: i32) -> (i32, i32) {
    %c0_i32 = arith.constant 0 : i32
    %c0_i32_0 = arith.constant 0 : i32
    return %c0_i32, %arg1 : i32, i32
  }
  func.func @transform_2(%arg0: i32, %arg1: i32) -> (i32, i32) {
    %c0_i32 = arith.constant 0 : i32
    %c0_i32_0 = arith.constant 0 : i32
    return %c0_i32, %arg1 : i32, i32
  }
  func.func @transform_3(%arg0: i32, %arg1: i32) -> (i32, i32) {
    %c0_i32 = arith.constant 0 : i32
    return %arg0, %arg1 : i32, i32
  }
}

</mosaic_0001>

<llo_original>
// kernel: tpu_custom_call.1
$region0: #{tpu_custom_call.1}
  #allocation0 [shape = 'u32[]', space=smem, size = 0x4, offset = 0x4, fixed_abs, tag = 'smem constant byte address 0x4 - core index']
  #allocation1 [shape = 'u32[144,128]{1,0:T(1,128)}', space=vmem, size = 0x12000, scoped, tag = 'internal scratch']
  %s0 = inlined_call_operand.hbm [shape: f32[32,32], index: 0, kind: input, shape index: {}]
  %s1 = inlined_call_operand.hbm [shape: f32[32,128], index: 1, kind: input, shape index: {}]
  %s2 = inlined_call_operand.vmem [shape: f32[1,128], index: 2, kind: input, shape index: {}]
  %s3 = inlined_call_operand.hbm [shape: f32[32,128], index: 3, kind: output, shape index: {}]
  %s4 = sld [smem:[#allocation0]]
  $region30: #{tpu_custom_call.1} parent=0
    _
  %s6 = ssub.s32 1, %s4
  %s7 = scalar_select 0, %s6, %s4
  $region1: #{tpu_custom_call.1} parent=0
    #allocation2 [shape = 'u8[16384]{0}', space=vmem, size = 0x4000, scoped, tag = 'input window, operand 0, single buffered']
    #allocation3 [shape = 's32[1]{0}', space=sflag, size = 0x4, scoped, tag = 'scoped memory for tpu_custom_call.1']
    #allocation4 [shape = 's32[1]{0}', space=sflag, size = 0x4, scoped, tag = 'scoped memory for tpu_custom_call.1']
    #allocation5 [shape = 'u8[16384]{0}', space=vmem, size = 0x4000, scoped, tag = 'input window, operand 1, single buffered']
    #allocation6 [shape = 's32[1]{0}', space=sflag, size = 0x4, scoped, tag = 'scoped memory for tpu_custom_call.1']
    #allocation7 [shape = 'u8[16384]{0}', space=vmem, size = 0x4000, scoped, tag = 'output window, operand 0, single buffered']
    %8 = vsyncpa [#allocation3], 0
    %9 = vsyncpa [#allocation6], 0
    %10 = vsyncpa [#allocation4], 0
    // Predicated region
    $region2: #{tpu_custom_call.1} parent=1 // pred_check
      _
    $region3: #{tpu_custom_call.1} parent=1 // pred_check_branch
      %12 = sbr.rel (0) target = $region5
    $region4: #{tpu_custom_call.1} parent=1 // pred_region
      %s14 = ssub.s32 512, 512
      %15 = vsyncadd [#allocation3], %s14
      %s16 = sshll.u32 [#allocation2], 4
      %s17 = int_to_ptr.vmem [resolvable:$true] %s16
      %22 = dma.hbm_to_vmem [thread:$0]  %s0, 512, %s17, [#allocation3], 128, 128, 8
    $region5: #{tpu_custom_call.1} parent=1 // pred_fallthru
      _
    // Predicated region
    $region6: #{tpu_custom_call.1} parent=1 // pred_check
      _
    $region7: #{tpu_custom_call.1} parent=1 // pred_check_branch
      %24 = sbr.rel (0) target = $region9
    $region8: #{tpu_custom_call.1} parent=1 // pred_region
      %s26 = ssub.s32 512, 512
      %27 = vsyncadd [#allocation6], %s26
      %s28 = sshll.u32 [#allocation5], 4
      %s29 = int_to_ptr.vmem [resolvable:$true] %s28
      %34 = dma.hbm_to_vmem [thread:$0]  %s1, 512, %s29, [#allocation6], 128, 128, 8
    $region9: #{tpu_custom_call.1} parent=1 // pred_fallthru
      _
    // Predicated region
    $region10: #{tpu_custom_call.1} parent=1 // pred_check
      _
    $region11: #{tpu_custom_call.1} parent=1 // pred_check_branch
      %36 = sbr.rel (0) target = $region13
    $region12: #{tpu_custom_call.1} parent=1 // pred_region
      _
    $region13: #{tpu_custom_call.1} parent=1 // pred_fallthru
      _
    // Predicated region
    $region14: #{tpu_custom_call.1} parent=1 // pred_check
      _
    $region15: #{tpu_custom_call.1} parent=1 // pred_check_branch
      %38 = sbr.rel (0) target = $region17
    $region16: #{tpu_custom_call.1} parent=1 // pred_region
      %39 = dma.done [#allocation3], 512
    $region17: #{tpu_custom_call.1} parent=1 // pred_fallthru
      _
    // Predicated region
    $region18: #{tpu_custom_call.1} parent=1 // pred_check
      _
    $region19: #{tpu_custom_call.1} parent=1 // pred_check_branch
      %41 = sbr.rel (0) target = $region21
    $region20: #{tpu_custom_call.1} parent=1 // pred_region
      %42 = dma.done [#allocation6], 512
    $region21: #{tpu_custom_call.1} parent=1 // pred_fallthru
      _
    %v43 = vld [vmem:[#allocation2] sm:$0xff]
    %v44 = vld [vmem:[#allocation2 + $0x8] sm:$0xff]
    %v45 = vld [vmem:[#allocation2 + $0x10] sm:$0xff]
    %v46 = vld [vmem:[#allocation2 + $0x18] sm:$0xff]
    %v47 = vld [vmem:[#allocation5] sm:$0xff]
    %v48 = vld [vmem:[#allocation5 + $0x8] sm:$0xff]
    %v49 = vld [vmem:[#allocation5 + $0x10] sm:$0xff]
    %v50 = vld [vmem:[#allocation5 + $0x18] sm:$0xff]
    %v51 = vld [vmem:[%s2] sm:$0x1]
    %v53 = vlaneseq
    %v54 = vshrl.u32 %v53, 7
    %v55 = vsub.s32 0, %v54
    %v56 = vrot.slane %v51, %v55
    %vm58 = vcmask 261120
    %v60 = vsel %vm58, %v43, 0
    %v63 = vsel %vm58, %v44, 0
    %v66 = vsel %vm58, %v45, 0
    %v69 = vsel %vm58, %v46, 0
    %71 = vmatprep.subr.mxu0 0.0
    %72 = vmatpush1.msra.mxu0 0.0
    %73 = vmatprep.subr.mxu0 0.0
    %74 = vmatpush1.msra.mxu0 0.0
    %75 = vmatprep.subr.mxu0 0.0
    %76 = vmatpush1.msra.mxu0 0.0
    %77 = vmatprep.subr.mxu0 0.0
    %78 = vmatpush1.msra.mxu0 0.0
    %79 = vmatprep.subr.mxu0 0.0
    %80 = vmatpush1.msra.mxu0 0.0
    %81 = vmatprep.subr.mxu0 0.0
    %82 = vmatpush1.msra.mxu0 0.0
    %83 = vmatprep.subr.mxu0 0.0
    %84 = vmatpush1.msra.mxu0 0.0
    %85 = vmatprep.subr.mxu0 0.0
    %86 = vmatpush1.msra.mxu0 0.0
    %87 = vmatprep.subr.mxu0 0.0
    %88 = vmatpush1.msra.mxu0 0.0
    %89 = vmatprep.subr.mxu0 0.0
    %90 = vmatpush1.msra.mxu0 0.0
    %91 = vmatprep.subr.mxu0 0.0
    %92 = vmatpush1.msra.mxu0 0.0
    %93 = vmatprep.subr.mxu0 0.0
    %94 = vmatpush1.msra.mxu0 0.0
    %95 = vmatprep.subr.mxu0 0.0
    %96 = vmatpush1.msra.mxu0 %v50
    %97 = vmatprep.subr.mxu0 0.0
    %98 = vmatpush1.msra.mxu0 %v49
    %99 = vmatprep.subr.mxu0 0.0
    %100 = vmatpush1.msra.mxu0 %v48
    %101 = vmatprep.subr.mxu0 0.0
    %102 = vmatpush1.msra.mxu0 %v47
    %103 = vmatprep.subr.mxu0 0.0
    %104 = vmatpush2.msra.mxu0 0.0
    %105 = vmatprep.subr.mxu0 0.0
    %106 = vmatpush2.msra.mxu0 0.0
    %107 = vmatprep.subr.mxu0 0.0
    %108 = vmatpush2.msra.mxu0 0.0
    %109 = vmatprep.subr.mxu0 0.0
    %110 = vmatpush2.msra.mxu0 0.0
    %111 = vmatprep.subr.mxu0 0.0
    %112 = vmatpush2.msra.mxu0 0.0
    %113 = vmatprep.subr.mxu0 0.0
    %114 = vmatpush2.msra.mxu0 0.0
    %115 = vmatprep.subr.mxu0 0.0
    %116 = vmatpush2.msra.mxu0 0.0
    %117 = vmatprep.subr.mxu0 0.0
    %118 = vmatpush2.msra.mxu0 0.0
    %119 = vmatprep.subr.mxu0 0.0
    %120 = vmatpush2.msra.mxu0 0.0
    %121 = vmatprep.subr.mxu0 0.0
    %122 = vmatpush2.msra.mxu0 0.0
    %123 = vmatprep.subr.mxu0 0.0
    %124 = vmatpush2.msra.mxu0 0.0
    %125 = vmatprep.subr.mxu0 0.0
    %126 = vmatpush2.msra.mxu0 0.0
    %127 = vmatprep.subr.mxu0 0.0
    %128 = vmatpush2.msra.mxu0 0.0
    %129 = vmatprep.subr.mxu0 0.0
    %130 = vmatpush2.msra.mxu0 0.0
    %131 = vmatprep.subr.mxu0 0.0
    %132 = vmatpush2.msra.mxu0 0.0
    %133 = vmatprep.subr.mxu0 0.0
    %134 = vmatpush2.msra.mxu0 0.0
    %135 = vmatprep.mubr.f32.mxu0 0.0
    %136 = vmatmul.mubr.f32.gmra.mxu0 %v60
    %v137 = vpop.f32.mrf.mxu0
    %v138 = vadd.f32 %v56, %v137
    %v139 = vpop.f32.mrf.mxu0
    %140 = vmatprep.mubr.f32.mxu0 0.0
    %141 = vmatmul.mubr.f32.gmra.mxu0 %v63
    %v142 = vpop.f32.mrf.mxu0
    %v143 = vadd.f32 %v56, %v142
    %v144 = vpop.f32.mrf.mxu0
    %145 = vmatprep.mubr.f32.mxu0 0.0
    %146 = vmatmul.mubr.f32.gmra.mxu0 %v66
    %v147 = vpop.f32.mrf.mxu0
    %v148 = vadd.f32 %v56, %v147
    %v149 = vpop.f32.mrf.mxu0
    %150 = vmatprep.mubr.f32.mxu0 0.0
    %151 = vmatmul.mubr.f32.gmra.mxu0 %v69
    %v152 = vpop.f32.mrf.mxu0
    %v153 = vadd.f32 %v56, %v152
    %v154 = vpop.f32.mrf.mxu0
    %155 = vdwg.mxu0
    %156 = vst [vmem:[#allocation7] sm:$0xff] %v138
    %157 = vst [vmem:[#allocation7 + $0x8] sm:$0xff] %v143
    %158 = vst [vmem:[#allocation7 + $0x10] sm:$0xff] %v148
    %159 = vst [vmem:[#allocation7 + $0x18] sm:$0xff] %v153
    // Predicated region
    $region22: #{tpu_custom_call.1} parent=1 // pred_check
      _
    $region23: #{tpu_custom_call.1} parent=1 // pred_check_branch
      %161 = sbr.rel (0) target = $region25
    $region24: #{tpu_custom_call.1} parent=1 // pred_region
      %s163 = ssub.s32 512, 512
      %164 = vsyncadd [#allocation4], %s163
      %s165 = sshll.u32 [#allocation7], 4
      %s166 = int_to_ptr.vmem [resolvable:$true] %s165
      %171 = dma.vmem_to_hbm [thread:$0]  %s166, 512, %s3, [#allocation4], 128, 128, 8
    $region25: #{tpu_custom_call.1} parent=1 // pred_fallthru
      _
    // Predicated region
    $region26: #{tpu_custom_call.1} parent=1 // pred_check
      _
    $region27: #{tpu_custom_call.1} parent=1 // pred_check_branch
      %173 = sbr.rel (0) target = $region29
    $region28: #{tpu_custom_call.1} parent=1 // pred_region
      %174 = dma.done [#allocation4], 512
    $region29: #{tpu_custom_call.1} parent=1 // pred_fallthru
      _
    %175 = vsyncpa [#allocation3], 1
    %176 = vsyncpa [#allocation6], 1
    %177 = vsyncpa [#allocation4], 1

</llo_original>
